<compile_context>
chip_gen: v5e
topology: v5e:2x2
jax: 0.10.0
libtpu: 0.0.40
codegen_flags: <defaults>
</compile_context>

<pallas_src>
import jax
import jax.numpy as jnp
from jax.experimental import pallas as pl
from jax.experimental.pallas import tpu as pltpu

_MIB = 1024 * 1024


def _h_swish_kernel(x_ref, o_ref):
    x = x_ref[...]
    # h_sigmoid(x) = relu6(x + 3) / 6 ;  h_swish(x) = x * h_sigmoid(x).
    # Constants are weak-typed so the whole body stays in the input dtype
    # (matches the PyTorch module) and costs exactly 5 VPU ops per element --
    # no extra casts or materialized broadcasts that could make VALU the
    # binding slot on v7x.
    hs = jnp.clip(x + 3.0, 0.0, 6.0) * (1.0 / 6.0)
    o_ref[...] = (x * hs).astype(o_ref.dtype)


def _tpu_geometry():
    """Return (vmem_capacity_bytes, tensorcores_per_chip) with safe fallback."""
    vmem_cap = 64 * _MIB  # conservative default: safe on every generation
    try:
        info = pltpu.get_tpu_info()
        vmem_cap = int(getattr(info, "vmem_capacity_bytes", vmem_cap))
    except Exception:
        pass
    # v7x has 64 MiB of VMEM per TensorCore and 2 TCs sharing a chip;
    # v5e/v6e have 128 MiB of VMEM and a single TC.
    num_tc = 2 if vmem_cap <= 64 * _MIB else 1
    return vmem_cap, num_tc


def _choose_lane(n_elem):
    """Widest lane-dense last dim that divides n_elem exactly (0 if none)."""
    for lane in (2048, 1024, 512, 256, 128):
        if n_elem % lane == 0:
            return lane
    return 0


def _call(x2d, tile_rows, vmem_limit, inplace):
    rows, lane = x2d.shape
    grid = (pl.cdiv(rows, tile_rows),)
    return pl.pallas_call(
        _h_swish_kernel,
        out_shape=jax.ShapeDtypeStruct((rows, lane), x2d.dtype),
        grid_spec=pltpu.PrefetchScalarGridSpec(
            num_scalar_prefetch=0,
            grid=grid,
            in_specs=[pl.BlockSpec((tile_rows, lane), lambda i: (i, 0))],
            out_specs=pl.BlockSpec((tile_rows, lane), lambda i: (i, 0)),
        ),
        compiler_params=pltpu.CompilerParams(
            dimension_semantics=("parallel",),
            vmem_limit_bytes=vmem_limit,
        ),
        # In-place write only when the caller opts in (and donates x at the
        # jit boundary); otherwise XLA would insert a defensive copy.
        input_output_aliases={0: 0} if inplace else {},
    )(x2d)


def h_swish(x, *, inplace=False):
    """Elementwise hard-swish; accepts any shape (NCHW expected).

    Set inplace=True (and donate x at the jit boundary) to let the kernel
    write its output over the input buffer via input_output_aliases.
    """
    orig_shape = x.shape
    n_elem = x.size
    if n_elem == 0:
        return x
    itemsize = jnp.dtype(x.dtype).itemsize
    # Native sublane packing: 8 rows for 32-bit, 16 for bf16/fp16, 32 for i8/fp8.
    sublane = max(8, 32 // itemsize)

    vmem_cap, num_tc = _tpu_geometry()
    if vmem_cap <= 64 * _MIB:
        # v7x: 64 MiB VMEM/TC -> ~11 MiB blocks; 4 resident buffers < 48 MiB
        # limit, leaving headroom for compiler internal scratch.
        vmem_limit = 48 * _MIB
        target_block_bytes = 11 * _MIB
    else:
        # v5e / v6e: 128 MiB VMEM -> bigger blocks to amortize the ~0.35 us
        # per-grid-step cost.
        vmem_limit = 96 * _MIB
        target_block_bytes = 16 * _MIB

    flat = x.reshape(-1)
    lane = _choose_lane(n_elem)

    if lane == 0:
        # Ragged: element count is not a multiple of 128.
        if n_elem * itemsize <= 512 * 1024:
            # Single full-extent (1, n_elem) block: block dims == array dims,
            # so the (8,128) divisibility rule does not apply and the final
            # partial vreg store is masked by Pallas.  One HBM read + one
            # write -- no pad/slice round-trips.  (Capped small because a
            # 1-sublane block is padded ~8x in VMEM.)
            out2d = _call(flat.reshape(1, n_elem), 1, vmem_limit, inplace)
            return out2d.reshape(orig_shape)
        # Huge AND ragged (rare corner case): pad to a lane multiple, run the
        # tiled path, slice the tail back off.
        # TODO(synk): write the ragged tail with an in-kernel masked store to
        # remove the extra pad/slice HBM passes in this corner case too.
        lane = 128
        pad = (-n_elem) % lane
        flat = jnp.pad(flat, (0, pad))

    rows = flat.size // lane
    x2d = flat.reshape(rows, lane)
    row_bytes = lane * itemsize

    tile_rows = max(sublane, target_block_bytes // row_bytes)
    tile_rows = min(tile_rows, rows)
    if tile_rows < rows:
        # Blocks that do not span the full row extent must be sublane-aligned.
        tile_rows = max(sublane, (tile_rows // sublane) * sublane)
    elif num_tc >= 2 and rows * row_bytes >= 2 * _MIB:
        # Whole array fits in one block.  On 2-TensorCore chips (v7x) split it
        # into two near-equal, sublane-aligned halves so both cores stream
        # comparable bytes over the "parallel" grid axis.  Single-TC chips
        # (v5e/v6e) keep the single block: a split there is pure per-step
        # overhead since the grid is just a sequential loop.
        tile_rows = pl.cdiv(pl.cdiv(rows, 2), sublane) * sublane

    out2d = _call(x2d, tile_rows, vmem_limit, inplace)

    out_flat = out2d.reshape(-1)
    if out_flat.size != n_elem:
        out_flat = out_flat[:n_elem]
    return out_flat.reshape(orig_shape)


def h_swish_ref(x):
    return x * (jnp.clip(x + 3.0, 0.0, 6.0) / 6.0)


if __name__ == "__main__":
    key = jax.random.PRNGKey(0)

    # NCHW like the PyTorch module would see: batch=2, channels=4, 16x16.
    x = jax.random.normal(key, (2, 4, 16, 16), dtype=jnp.float32) * 4.0
    out = jax.block_until_ready(h_swish(x))
    ref = h_swish_ref(x)
    assert out.shape == x.shape and out.dtype == x.dtype
    assert jnp.allclose(out, ref, atol=1e-6, rtol=1e-6), "mismatch vs reference"

    # Ragged path: size not a multiple of 128 -> single full-extent block,
    # no pad/slice HBM round-trips.
    x2 = jax.random.normal(jax.random.PRNGKey(1), (2, 3, 5, 7), dtype=jnp.float32) * 4.0
    out2 = jax.block_until_ready(h_swish(x2))
    ref2 = h_swish_ref(x2)
    assert out2.shape == x2.shape and out2.dtype == x2.dtype
    assert jnp.allclose(out2, ref2, atol=1e-6, rtol=1e-6), "mismatch vs reference (ragged)"

    # bf16 path exercises the 16-row sublane packing and in-dtype compute.
    x3 = (jax.random.normal(jax.random.PRNGKey(2), (2, 4, 16, 16), jnp.float32) * 4.0
          ).astype(jnp.bfloat16)
    out3 = jax.block_until_ready(h_swish(x3))
    assert out3.shape == x3.shape and out3.dtype == jnp.bfloat16
    assert jnp.allclose(out3.astype(jnp.float32),
                        h_swish_ref(x3.astype(jnp.float32)),
                        atol=3e-2, rtol=3e-2), "mismatch vs reference (bf16)"

    print("KERNEL_OK")
</pallas_src>

<mosaic_0001>
module attributes {stable_mosaic.version = 11 : i64} {
  func.func @_h_swish_kernel(%arg0: i32, %arg1: memref<1x2048xf32, #tpu.memory_space<vmem>>, %arg2: memref<1x2048xf32, #tpu.memory_space<vmem>>) attributes {dimension_semantics = [#tpu.dimension_semantics<parallel>], iteration_bounds = array<i64: 1>, scalar_prefetch = 0 : i64, scratch_operands = 0 : i64, tpu.core_type = #tpu.core_type<tc>, window_params = [{transform_indices = @transform_0, window_bounds = array<i64: 1, 2048>}, {transform_indices = @transform_1, window_bounds = array<i64: 1, 2048>}]} {
    %c0 = arith.constant 0 : index
    %c0_0 = arith.constant 0 : index
    %0 = vector.load %arg1[%c0, %c0_0] : memref<1x2048xf32, #tpu.memory_space<vmem>>, vector<1x2048xf32>
    %cst = arith.constant 3.000000e+00 : f32
    %1 = vector.broadcast %cst : f32 to vector<1x2048xf32>
    %2 = arith.addf %0, %1 : vector<1x2048xf32>
    %cst_1 = arith.constant 0.000000e+00 : f32
    %cst_2 = arith.constant 6.000000e+00 : f32
    %3 = vector.broadcast %cst_1 : f32 to vector<1x2048xf32>
    %4 = arith.maximumf %3, %2 : vector<1x2048xf32>
    %5 = vector.broadcast %cst_2 : f32 to vector<1x2048xf32>
    %6 = arith.minimumf %5, %4 : vector<1x2048xf32>
    %cst_3 = arith.constant 0.166666672 : f32
    %7 = vector.broadcast %cst_3 : f32 to vector<1x2048xf32>
    %8 = arith.mulf %6, %7 : vector<1x2048xf32>
    %9 = arith.mulf %0, %8 : vector<1x2048xf32>
    %c0_4 = arith.constant 0 : index
    %c0_5 = arith.constant 0 : index
    %10 = vector.load %arg2[%c0_4, %c0_5] : memref<1x2048xf32, #tpu.memory_space<vmem>>, vector<1x2048xf32>
    tpu.vector_store %arg2[%c0_4, %c0_5], %9 {strides = array<i32>} : memref<1x2048xf32, #tpu.memory_space<vmem>>, vector<1x2048xf32>,
    return
  }
  func.func @transform_0(%arg0: i32) -> (i32, i32) {
    %c0_i32 = arith.constant 0 : i32
    %c0_i32_0 = arith.constant 0 : i32
    return %arg0, %c0_i32 : i32, i32
  }
  func.func @transform_1(%arg0: i32) -> (i32, i32) {
    %c0_i32 = arith.constant 0 : i32
    %c0_i32_0 = arith.constant 0 : i32
    return %arg0, %c0_i32 : i32, i32
  }
}

</mosaic_0001>

<llo_original>
// kernel: tpu_custom_call.1
$region0: #{tpu_custom_call.1}
  #allocation0 [shape = 'u32[]', space=smem, size = 0x4, offset = 0x4, fixed_abs, tag = 'smem constant byte address 0x4 - core index']
  #allocation1 [shape = 'u32[72,128]{1,0:T(1,128)}', space=vmem, size = 0x9000, scoped, tag = 'internal scratch']
  %s0 = inlined_call_operand.hbm [shape: f32[1,2048], index: 0, kind: input, shape index: {}]
  %s1 = inlined_call_operand.hbm [shape: f32[1,2048], index: 1, kind: output, shape index: {}]
  %s2 = sld [smem:[#allocation0]]
  $region18: #{tpu_custom_call.1} parent=0
    _
  %s4 = ssub.s32 1, %s2
  %s5 = scalar_select 0, %s4, %s2
  $region1: #{tpu_custom_call.1} parent=0
    #allocation2 [shape = 'u8[8192]{0}', space=vmem, size = 0x2000, scoped, tag = 'input window, operand 0, single buffered']
    #allocation3 [shape = 's32[1]{0}', space=sflag, size = 0x4, scoped, tag = 'scoped memory for tpu_custom_call.1']
    #allocation4 [shape = 's32[1]{0}', space=sflag, size = 0x4, scoped, tag = 'scoped memory for tpu_custom_call.1']
    #allocation5 [shape = 'u8[8192]{0}', space=vmem, size = 0x2000, scoped, tag = 'output window, operand 0, single buffered']
    %6 = vsyncpa [#allocation3], 0
    %7 = vsyncpa [#allocation4], 0
    // Predicated region
    $region2: #{tpu_custom_call.1} parent=1 // pred_check
      _
    $region3: #{tpu_custom_call.1} parent=1 // pred_check_branch
      %9 = sbr.rel (0) target = $region5
    $region4: #{tpu_custom_call.1} parent=1 // pred_region
      %11 = vsyncadd [#allocation3], 0
      %s13 = sshll.u32 %s0, 4
      %s14 = int_to_ptr.hbm [resolvable:$true] %s13
      %s15 = sshll.u32 [#allocation2], 4
      %s16 = int_to_ptr.vmem [resolvable:$true] %s15
      %18 = dma.hbm_to_vmem [thread:$0]  %s14, 256, %s16, [#allocation3]
    $region5: #{tpu_custom_call.1} parent=1 // pred_fallthru
      _
    // Predicated region
    $region6: #{tpu_custom_call.1} parent=1 // pred_check
      _
    $region7: #{tpu_custom_call.1} parent=1 // pred_check_branch
      %20 = sbr.rel (0) target = $region9
    $region8: #{tpu_custom_call.1} parent=1 // pred_region
      %22 = dma.done [#allocation3], 256
    $region9: #{tpu_custom_call.1} parent=1 // pred_fallthru
      _
    %v23 = vld [vmem:[#allocation2] sm:$0xff]
    %v24 = vld [vmem:[#allocation2 + $0x8] sm:$0xff]
    %v25 = vadd.f32 %v23, 3.0
    %v26 = vadd.f32 %v24, 3.0
    %v27 = vmax.f32 %v25, 0.0
    %v28 = vmax.f32 %v26, 0.0
    %v29 = vmin.f32 %v27, 6.0
    %v30 = vmin.f32 %v28, 6.0
    %v31 = vmul.f32 %v29, 0.16666667
    %v32 = vmul.f32 %v30, 0.16666667
    %v33 = vmul.f32 %v23, %v31
    %v34 = vmul.f32 %v24, %v32
    %35 = vst [vmem:[#allocation5] sm:$0xff] %v33
    %36 = vst [vmem:[#allocation5 + $0x8] sm:$0xff] %v34
    // Predicated region
    $region10: #{tpu_custom_call.1} parent=1 // pred_check
      _
    $region11: #{tpu_custom_call.1} parent=1 // pred_check_branch
      %38 = sbr.rel (0) target = $region13
    $region12: #{tpu_custom_call.1} parent=1 // pred_region
      %40 = vsyncadd [#allocation4], 0
      %s42 = sshll.u32 [#allocation5], 4
      %s43 = int_to_ptr.vmem [resolvable:$true] %s42
      %s44 = sshll.u32 %s1, 4
      %s45 = int_to_ptr.hbm [resolvable:$true] %s44
      %47 = dma.vmem_to_hbm [thread:$0]  %s43, 256, %s45, [#allocation4]
    $region13: #{tpu_custom_call.1} parent=1 // pred_fallthru
      _
    // Predicated region
    $region14: #{tpu_custom_call.1} parent=1 // pred_check
      _
    $region15: #{tpu_custom_call.1} parent=1 // pred_check_branch
      %49 = sbr.rel (0) target = $region17
    $region16: #{tpu_custom_call.1} parent=1 // pred_region
      %51 = dma.done [#allocation4], 256
    $region17: #{tpu_custom_call.1} parent=1 // pred_fallthru
      _
    %52 = vsyncpa [#allocation3], 1
    %53 = vsyncpa [#allocation4], 1

</llo_original>
